<compile_context>
chip_gen: v6e
topology: v6e:2x2x1
jax: 0.10.0
libtpu: 0.0.40
codegen_flags: <defaults>
</compile_context>

<pallas_src>
import math

import jax
import jax.numpy as jnp
from jax.experimental import pallas as pl
from jax.experimental.pallas import tpu as pltpu


def make_positional_encoding(d_model: int, max_len: int = 1000) -> jnp.ndarray:
    """Sinusoidal positional-encoding table, shape (max_len, d_model), float32."""
    position = jnp.arange(0, max_len, dtype=jnp.float32)[:, None]             # (max_len, 1)
    div_term = jnp.exp(
        jnp.arange(0, d_model, 2, dtype=jnp.float32) * (-math.log(10000.0) / d_model)
    )                                                                          # (ceil(d/2),)
    angles = position * div_term                                               # (max_len, ceil(d/2))
    pe = jnp.zeros((max_len, d_model), dtype=jnp.float32)
    pe = pe.at[:, 0::2].set(jnp.sin(angles))
    pe = pe.at[:, 1::2].set(jnp.cos(angles)[:, : d_model // 2])
    return pe


# ----------------------------- kernels --------------------------------------

def _add_pe_kernel_3d(x_ref, pe_ref, o_ref):
    # x/o: (tile_s, batch, d_model); pe: (tile_s, d_model).  Only used when batch
    # is a multiple of the sublane pack, so the sublane broadcast fills whole
    # vregs and stores are unmasked.
    o_ref[...] = x_ref[...] + pe_ref[...][:, None, :]


def _make_add_pe_kernel_2d(batch: int):
    def kernel(x_ref, pe_ref, o_ref):
        # x/o: (tile_s, batch*d_model) -- lane-dense last dim (the biggest single
        # store lever).  pe is replicated along lanes with a VPU copy (no XLU).
        o_ref[...] = x_ref[...] + jnp.tile(pe_ref[...], (1, batch))
    return kernel


# ----------------------------- tiling helpers --------------------------------

def _chip_budget_and_cap():
    """(per-block byte budget for x, vmem_limit cap) tuned per TPU generation."""
    try:
        kind = jax.devices()[0].device_kind.lower()
    except Exception:  # pragma: no cover - defensive
        kind = ""
    if "v5 lite" in kind or "v5e" in kind or "v5litepod" in kind:
        return 2 << 20, 32 << 20      # v5e: HBM-bound already at 2 MiB blocks
    if "v6" in kind:
        return 8 << 20, 64 << 20      # v6e: 128 MiB physical VMEM, big tiles cheap
    return 6 << 20, 48 << 20          # v7x / other: 64 MiB physical, stay < ~48


def _sublane_pack(itemsize: int) -> int:
    # f32 -> 8, bf16/f16 -> 16, int8/fp8 -> 32 rows per packed sublane tile.
    return max(8, 8 * (4 // max(1, itemsize)))


def _choose_tile_s(seq: int, row_bytes: int, sublane: int, budget_bytes: int,
                   min_steps: int = 4) -> int:
    """Rows of seq per block.

    Hard rule: the result is a multiple of `sublane` OR exactly `seq` -- never a
    value in 1..sublane-1 when seq is larger.  If a single row exceeds the byte
    budget we grow the budget (take `sublane` rows) rather than emit a sub-pack
    tile.  When seq is large enough we also cap tile_s so the grid has at least
    `min_steps` steps (megacore split + double buffering on v7x).
    """
    if seq <= sublane:
        return seq                                   # full array dim: always legal
    rows = max(sublane, budget_bytes // max(1, row_bytes))
    tile_s = min(seq, rows)
    if seq >= min_steps * sublane:
        tile_s = min(tile_s, max(sublane, seq // min_steps))
    if tile_s < seq:
        tile_s -= tile_s % sublane                   # multiple of the sublane pack
        tile_s = max(tile_s, sublane)
    return tile_s


# ----------------------------- wrapper ---------------------------------------

def positional_encoding_forward(x: jnp.ndarray, pe: jnp.ndarray,
                                *, donate_x: bool = False,
                                force_pallas: bool = False) -> jnp.ndarray:
    """x: (seq, batch, d_model); pe: (max_len, d_model) or torch-style (max_len,1,d_model)."""
    seq, batch, d_model = x.shape
    if pe.ndim == 3:                      # accept the torch buffer layout too
        pe = pe[:, 0, :]
    assert seq <= pe.shape[0], f"seq={seq} exceeds positional table rows={pe.shape[0]}"
    pe_slice = pe[:seq].astype(x.dtype)   # cast once in the wrapper, not per element

    itemsize = jnp.dtype(x.dtype).itemsize
    total_bytes = seq * batch * d_model * itemsize

    # Tiny-shape fast path: a pallas_call is pure launch/DMA-setup overhead here.
    if total_bytes < (1 << 20) and not force_pallas:
        return x + pe_slice[:, None, :]

    sublane = _sublane_pack(itemsize)
    budget_bytes, vmem_cap = _chip_budget_and_cap()
    row_bytes = batch * d_model * itemsize
    tile_s = _choose_tile_s(seq, row_bytes, sublane, budget_bytes)
    grid = (pl.cdiv(seq, tile_s),)

    # Explicit VMEM budget: double-buffered x-in, out and pe blocks + slack.
    blk_x = tile_s * row_bytes
    blk_pe = tile_s * d_model * itemsize
    vmem_limit = int(min(max(2 * (2 * blk_x + blk_pe) + (2 << 20), 16 << 20), vmem_cap))

    cost = pl.CostEstimate(
        flops=seq * batch * d_model,
        transcendentals=0,
        bytes_accessed=(2 * seq * batch * d_model + seq * d_model) * itemsize,
    )
    compiler_params = pltpu.CompilerParams(
        dimension_semantics=("parallel",),    # shards seq tiles across TCs on v7x
        vmem_limit_bytes=vmem_limit,
    )
    pe_spec = pl.BlockSpec((tile_s, d_model), lambda i: (i, 0))

    if batch % sublane == 0:
        # Batch fills whole sublane packs: keep the natural 3-D layout.
        out = pl.pallas_call(
            _add_pe_kernel_3d,
            out_shape=jax.ShapeDtypeStruct((seq, batch, d_model), x.dtype),
            grid_spec=pltpu.PrefetchScalarGridSpec(
                num_scalar_prefetch=0,
                grid=grid,
                in_specs=[
                    pl.BlockSpec((tile_s, batch, d_model), lambda i: (i, 0, 0)),
                    pe_spec,
                ],
                out_specs=pl.BlockSpec((tile_s, batch, d_model), lambda i: (i, 0, 0)),
            ),
            compiler_params=compiler_params,
            cost_estimate=cost,
            input_output_aliases=({0: 0} if donate_x else {}),
        )(x, pe_slice)
        return out

    # Unaligned batch: flatten to a lane-dense 2-D slab (free, row-major) so the
    # output last dim is a large multiple of 128 instead of wasting sublanes.
    x2d = x.reshape(seq, batch * d_model)
    out2d = pl.pallas_call(
        _make_add_pe_kernel_2d(batch),
        out_shape=jax.ShapeDtypeStruct((seq, batch * d_model), x.dtype),
        grid_spec=pltpu.PrefetchScalarGridSpec(
            num_scalar_prefetch=0,
            grid=grid,
            in_specs=[
                pl.BlockSpec((tile_s, batch * d_model), lambda i: (i, 0)),
                pe_spec,
            ],
            out_specs=pl.BlockSpec((tile_s, batch * d_model), lambda i: (i, 0)),
        ),
        compiler_params=compiler_params,
        cost_estimate=cost,
        input_output_aliases=({0: 0} if donate_x else {}),
    )(x2d, pe_slice)
    return out2d.reshape(seq, batch, d_model)


if __name__ == "__main__":
    max_len = 1000
    key = jax.random.PRNGKey(0)
    k1, k2 = jax.random.split(key)

    # 1) Sublane-aligned shape -> 3-D kernel path (force the Pallas path so the
    #    kernel itself is exercised despite the tiny-shape XLA fallback).
    seq, batch, d_model = 16, 8, 128
    pe = make_positional_encoding(d_model, max_len)
    x = jax.random.normal(k1, (seq, batch, d_model), dtype=jnp.float32)
    ref = x + pe[:seq][:, None, :]
    out = jax.block_until_ready(positional_encoding_forward(x, pe, force_pallas=True))
    assert out.shape == (seq, batch, d_model)
    assert jnp.allclose(out, ref, atol=1e-6), "mismatch vs reference (aligned 3-D path)"

    # 2) Unaligned batch from the original module's usage -> lane-dense 2-D path.
    seq2, batch2, d_model2 = 8, 2, 32
    pe2 = make_positional_encoding(d_model2, max_len)
    x2 = jax.random.normal(k2, (seq2, batch2, d_model2), dtype=jnp.float32)
    ref2 = x2 + pe2[:seq2][:, None, :]
    out2 = jax.block_until_ready(positional_encoding_forward(x2, pe2, force_pallas=True))
    assert jnp.allclose(out2, ref2, atol=1e-6), "mismatch vs reference (2-D lane path)"

    # 3) Tiny-shape fast path (pure XLA add) still matches the reference.
    out3 = jax.block_until_ready(positional_encoding_forward(x2, pe2))
    assert jnp.allclose(out3, ref2, atol=1e-6), "mismatch vs reference (fast path)"

    print("KERNEL_OK")
</pallas_src>

<mosaic_0001>
module attributes {stable_mosaic.version = 11 : i64} {
  func.func @_add_pe_kernel_3d(%arg0: i32, %arg1: memref<16x8x128xf32, #tpu.memory_space<vmem>>, %arg2: memref<16x128xf32, #tpu.memory_space<vmem>>, %arg3: memref<16x8x128xf32, #tpu.memory_space<vmem>>) attributes {dimension_semantics = [#tpu.dimension_semantics<parallel>], iteration_bounds = array<i64: 1>, scalar_prefetch = 0 : i64, scratch_operands = 0 : i64, tpu.core_type = #tpu.core_type<tc>, window_params = [{transform_indices = @transform_0, window_bounds = array<i64: 16, 8, 128>}, {transform_indices = @transform_1, window_bounds = array<i64: 16, 128>}, {transform_indices = @transform_2, window_bounds = array<i64: 16, 8, 128>}]} {
    %c0 = arith.constant 0 : index
    %c0_0 = arith.constant 0 : index
    %c0_1 = arith.constant 0 : index
    %0 = vector.load %arg1[%c0, %c0_0, %c0_1] : memref<16x8x128xf32, #tpu.memory_space<vmem>>, vector<16x8x128xf32>
    %c0_2 = arith.constant 0 : index
    %c0_3 = arith.constant 0 : index
    %1 = vector.load %arg2[%c0_2, %c0_3] : memref<16x128xf32, #tpu.memory_space<vmem>>, vector<16x128xf32>
    %2 = vector.shape_cast %1 : vector<16x128xf32> to vector<16x1x128xf32>
    %3 = vector.broadcast %2 : vector<16x1x128xf32> to vector<16x8x128xf32>
    %4 = arith.addf %0, %3 : vector<16x8x128xf32>
    %c0_4 = arith.constant 0 : index
    %c0_5 = arith.constant 0 : index
    %c0_6 = arith.constant 0 : index
    %5 = vector.load %arg3[%c0_4, %c0_5, %c0_6] : memref<16x8x128xf32, #tpu.memory_space<vmem>>, vector<16x8x128xf32>
    tpu.vector_store %arg3[%c0_4, %c0_5, %c0_6], %4 {strides = array<i32>} : memref<16x8x128xf32, #tpu.memory_space<vmem>>, vector<16x8x128xf32>,
    return
  }
  func.func @transform_0(%arg0: i32) -> (i32, i32, i32) {
    %c0_i32 = arith.constant 0 : i32
    %c0_i32_0 = arith.constant 0 : i32
    %c0_i32_1 = arith.constant 0 : i32
    return %arg0, %c0_i32, %c0_i32_0 : i32, i32, i32
  }
  func.func @transform_1(%arg0: i32) -> (i32, i32) {
    %c0_i32 = arith.constant 0 : i32
    %c0_i32_0 = arith.constant 0 : i32
    return %arg0, %c0_i32 : i32, i32
  }
  func.func @transform_2(%arg0: i32) -> (i32, i32, i32) {
    %c0_i32 = arith.constant 0 : i32
    %c0_i32_0 = arith.constant 0 : i32
    %c0_i32_1 = arith.constant 0 : i32
    return %arg0, %c0_i32, %c0_i32_0 : i32, i32, i32
  }
}

</mosaic_0001>

<llo_original>
// kernel: tpu_custom_call.1
$region0: #{tpu_custom_call.1}
  #allocation0 [shape = 'u32[]', space=smem, size = 0x4, offset = 0x4, fixed_abs, tag = 'smem constant byte address 0x4 - core index']
  #allocation1 [shape = 'u32[144,128]{1,0:T(1,128)}', space=vmem, size = 0x12000, scoped, tag = 'internal scratch']
  %s0 = inlined_call_operand.hbm [shape: f32[16,8,128], index: 0, kind: input, shape index: {}]
  %s1 = inlined_call_operand.hbm [shape: f32[16,128], index: 1, kind: input, shape index: {}]
  %s2 = inlined_call_operand.hbm [shape: f32[16,8,128], index: 2, kind: output, shape index: {}]
  %s3 = sld [smem:[#allocation0]]
  $region26: #{tpu_custom_call.1} parent=0
    _
  %s5 = ssub.s32 1, %s3
  %s6 = scalar_select 0, %s5, %s3
  $region1: #{tpu_custom_call.1} parent=0
    #allocation2 [shape = 'u8[65536]{0}', space=vmem, size = 0x10000, scoped, tag = 'input window, operand 0, single buffered']
    #allocation3 [shape = 's32[1]{0}', space=sflag, size = 0x4, scoped, tag = 'scoped memory for tpu_custom_call.1']
    #allocation4 [shape = 's32[1]{0}', space=sflag, size = 0x4, scoped, tag = 'scoped memory for tpu_custom_call.1']
    #allocation5 [shape = 'u8[8192]{0}', space=vmem, size = 0x2000, scoped, tag = 'input window, operand 1, single buffered']
    #allocation6 [shape = 's32[1]{0}', space=sflag, size = 0x4, scoped, tag = 'scoped memory for tpu_custom_call.1']
    #allocation7 [shape = 'u8[65536]{0}', space=vmem, size = 0x10000, scoped, tag = 'output window, operand 0, single buffered']
    %7 = vsyncpa [#allocation3], 0
    %8 = vsyncpa [#allocation6], 0
    %9 = vsyncpa [#allocation4], 0
    // Predicated region
    $region2: #{tpu_custom_call.1} parent=1 // pred_check
      _
    $region3: #{tpu_custom_call.1} parent=1 // pred_check_branch
      %11 = sbr.rel (0) target = $region5
    $region4: #{tpu_custom_call.1} parent=1 // pred_region
      %s13 = ssub.s32 2048, 2048
      %14 = vsyncadd [#allocation3], %s13
      %s15 = sshll.u32 [#allocation2], 4
      %s16 = int_to_ptr.vmem [resolvable:$true] %s15
      %21 = dma.hbm_to_vmem [thread:$0]  %s0, 2048, %s16, [#allocation3], 128, 128, 8
    $region5: #{tpu_custom_call.1} parent=1 // pred_fallthru
      _
    // Predicated region
    $region6: #{tpu_custom_call.1} parent=1 // pred_check
      _
    $region7: #{tpu_custom_call.1} parent=1 // pred_check_branch
      %23 = sbr.rel (0) target = $region9
    $region8: #{tpu_custom_call.1} parent=1 // pred_region
      %s25 = ssub.s32 256, 256
      %26 = vsyncadd [#allocation6], %s25
      %s27 = sshll.u32 [#allocation5], 4
      %s28 = int_to_ptr.vmem [resolvable:$true] %s27
      %33 = dma.hbm_to_vmem [thread:$0]  %s1, 256, %s28, [#allocation6], 128, 128, 8
    $region9: #{tpu_custom_call.1} parent=1 // pred_fallthru
      _
    // Predicated region
    $region10: #{tpu_custom_call.1} parent=1 // pred_check
      _
    $region11: #{tpu_custom_call.1} parent=1 // pred_check_branch
      %35 = sbr.rel (0) target = $region13
    $region12: #{tpu_custom_call.1} parent=1 // pred_region
      %36 = dma.done [#allocation3], 2048
    $region13: #{tpu_custom_call.1} parent=1 // pred_fallthru
      _
    // Predicated region
    $region14: #{tpu_custom_call.1} parent=1 // pred_check
      _
    $region15: #{tpu_custom_call.1} parent=1 // pred_check_branch
      %38 = sbr.rel (0) target = $region17
    $region16: #{tpu_custom_call.1} parent=1 // pred_region
      %39 = dma.done [#allocation6], 256
    $region17: #{tpu_custom_call.1} parent=1 // pred_fallthru
      _
    %v40 = vld [vmem:[#allocation2] sm:$0xff]
    %v41 = vld [vmem:[#allocation2 + $0x8] sm:$0xff]
    %v42 = vld [vmem:[#allocation2 + $0x10] sm:$0xff]
    %v43 = vld [vmem:[#allocation2 + $0x18] sm:$0xff]
    %v44 = vld [vmem:[#allocation2 + $0x20] sm:$0xff]
    %v45 = vld [vmem:[#allocation2 + $0x28] sm:$0xff]
    %v46 = vld [vmem:[#allocation2 + $0x30] sm:$0xff]
    %v47 = vld [vmem:[#allocation2 + $0x38] sm:$0xff]
    %v48 = vld [vmem:[#allocation2 + $0x40] sm:$0xff]
    %v49 = vld [vmem:[#allocation2 + $0x48] sm:$0xff]
    %v50 = vld [vmem:[#allocation2 + $0x50] sm:$0xff]
    %v51 = vld [vmem:[#allocation2 + $0x58] sm:$0xff]
    %v52 = vld [vmem:[#allocation2 + $0x60] sm:$0xff]
    %v53 = vld [vmem:[#allocation2 + $0x68] sm:$0xff]
    %v54 = vld [vmem:[#allocation2 + $0x70] sm:$0xff]
    %v55 = vld [vmem:[#allocation2 + $0x78] sm:$0xff]
    %v56 = vld [vmem:[#allocation5] sm:$0xff]
    %v57 = vld [vmem:[#allocation5 + $0x8] sm:$0xff]
    %v60 = vcombine.high %v56, %v56
    %v62 = vunpack.c.l.s4 1966171168
    %v63 = vunpack.c.0.s8 %v62
    %v64 = vlaneseq
    %v65 = vshrl.u32 %v64, 7
    %v66 = vsub.s32 %v63, %v65
    %v67 = vrot.slane %v56, %v66
    %v69 = vunpack.c.l.s4 1966171168
    %v70 = vunpack.c.0.s8 %v69
    %v71 = vlaneseq
    %v72 = vshrl.u32 %v71, 7
    %v73 = vsub.s32 %v70, %v72
    %v74 = vrot.slane %v60, %v73
    %v75 = vcombine.high %v67, %v67
    %v76 = vcombine.high %v74, %v74
    %v78 = vunpack.c.l.s4 1966171168
    %v79 = vunpack.c.0.s8 %v78
    %v80 = vlaneseq
    %v81 = vshrl.u32 %v80, 7
    %v82 = vsub.s32 %v79, %v81
    %v83 = vrot.slane %v67, %v82
    %v85 = vunpack.c.l.s4 1966171168
    %v86 = vunpack.c.0.s8 %v85
    %v87 = vlaneseq
    %v88 = vshrl.u32 %v87, 7
    %v89 = vsub.s32 %v86, %v88
    %v90 = vrot.slane %v74, %v89
    %v92 = vunpack.c.l.s4 1966171168
    %v93 = vunpack.c.0.s8 %v92
    %v94 = vlaneseq
    %v95 = vshrl.u32 %v94, 7
    %v96 = vsub.s32 %v93, %v95
    %v97 = vrot.slane %v75, %v96
    %v99 = vunpack.c.l.s4 1966171168
    %v100 = vunpack.c.0.s8 %v99
    %v101 = vlaneseq
    %v102 = vshrl.u32 %v101, 7
    %v103 = vsub.s32 %v100, %v102
    %v104 = vrot.slane %v76, %v103
    %v105 = vcombine.high %v83, %v83
    %v106 = vcombine.high %v90, %v90
    %v107 = vcombine.high %v97, %v97
    %v108 = vcombine.high %v104, %v104
    %v109 = vcombine.high %v57, %v57
    %v111 = vunpack.c.l.s4 1966171168
    %v112 = vunpack.c.0.s8 %v111
    %v113 = vlaneseq
    %v114 = vshrl.u32 %v113, 7
    %v115 = vsub.s32 %v112, %v114
    %v116 = vrot.slane %v57, %v115
    %v118 = vunpack.c.l.s4 1966171168
    %v119 = vunpack.c.0.s8 %v118
    %v120 = vlaneseq
    %v121 = vshrl.u32 %v120, 7
    %v122 = vsub.s32 %v119, %v121
    %v123 = vrot.slane %v109, %v122
    %v124 = vcombine.high %v116, %v116
    %v125 = vcombine.high %v123, %v123
    %v127 = vunpack.c.l.s4 1966171168
    %v128 = vunpack.c.0.s8 %v127
    %v129 = vlaneseq
    %v130 = vshrl.u32 %v129, 7
    %v131 = vsub.s32 %v128, %v130
    %v132 = vrot.slane %v116, %v131
    %v134 = vunpack.c.l.s4 1966171168
    %v135 = vunpack.c.0.s8 %v134
    %v136 = vlaneseq
    %v137 = vshrl.u32 %v136, 7
    %v138 = vsub.s32 %v135, %v137
    %v139 = vrot.slane %v123, %v138
    %v141 = vunpack.c.l.s4 1966171168
    %v142 = vunpack.c.0.s8 %v141
    %v143 = vlaneseq
    %v144 = vshrl.u32 %v143, 7
    %v145 = vsub.s32 %v142, %v144
    %v146 = vrot.slane %v124, %v145
    %v148 = vunpack.c.l.s4 1966171168
    %v149 = vunpack.c.0.s8 %v148
    %v150 = vlaneseq
    %v151 = vshrl.u32 %v150, 7
    %v152 = vsub.s32 %v149, %v151
    %v153 = vrot.slane %v125, %v152
    %v154 = vcombine.high %v132, %v132
    %v155 = vcombine.high %v139, %v139
    %v156 = vcombine.high %v146, %v146
    %v157 = vcombine.high %v153, %v153
    %v158 = vlaneseq
    %v159 = vshrl.u32 %v158, 7
    %v160 = vsub.s32 0, %v159
    %v161 = vrot.slane %v83, %v160
    %v162 = vlaneseq
    %v163 = vshrl.u32 %v162, 7
    %v164 = vsub.s32 0, %v163
    %v165 = vrot.slane %v97, %v164
    %v166 = vlaneseq
    %v167 = vshrl.u32 %v166, 7
    %v168 = vsub.s32 0, %v167
    %v169 = vrot.slane %v105, %v168
    %v170 = vlaneseq
    %v171 = vshrl.u32 %v170, 7
    %v172 = vsub.s32 0, %v171
    %v173 = vrot.slane %v107, %v172
    %v174 = vlaneseq
    %v175 = vshrl.u32 %v174, 7
    %v176 = vsub.s32 0, %v175
    %v177 = vrot.slane %v90, %v176
    %v178 = vlaneseq
    %v179 = vshrl.u32 %v178, 7
    %v180 = vsub.s32 0, %v179
    %v181 = vrot.slane %v104, %v180
    %v182 = vlaneseq
    %v183 = vshrl.u32 %v182, 7
    %v184 = vsub.s32 0, %v183
    %v185 = vrot.slane %v106, %v184
    %v186 = vlaneseq
    %v187 = vshrl.u32 %v186, 7
    %v188 = vsub.s32 0, %v187
    %v189 = vrot.slane %v108, %v188
    %v190 = vlaneseq
    %v191 = vshrl.u32 %v190, 7
    %v192 = vsub.s32 0, %v191
    %v193 = vrot.slane %v132, %v192
    %v194 = vlaneseq
    %v195 = vshrl.u32 %v194, 7
    %v196 = vsub.s32 0, %v195
    %v197 = vrot.slane %v146, %v196
    %v198 = vlaneseq
    %v199 = vshrl.u32 %v198, 7
    %v200 = vsub.s32 0, %v199
    %v201 = vrot.slane %v154, %v200
    %v202 = vlaneseq
    %v203 = vshrl.u32 %v202, 7
    %v204 = vsub.s32 0, %v203
    %v205 = vrot.slane %v156, %v204
    %v206 = vlaneseq
    %v207 = vshrl.u32 %v206, 7
    %v208 = vsub.s32 0, %v207
    %v209 = vrot.slane %v139, %v208
    %v210 = vlaneseq
    %v211 = vshrl.u32 %v210, 7
    %v212 = vsub.s32 0, %v211
    %v213 = vrot.slane %v153, %v212
    %v214 = vlaneseq
    %v215 = vshrl.u32 %v214, 7
    %v216 = vsub.s32 0, %v215
    %v217 = vrot.slane %v155, %v216
    %v218 = vlaneseq
    %v219 = vshrl.u32 %v218, 7
    %v220 = vsub.s32 0, %v219
    %v221 = vrot.slane %v157, %v220
    %v238 = vadd.f32 %v40, %v161
    %v239 = vadd.f32 %v41, %v165
    %v240 = vadd.f32 %v42, %v169
    %v241 = vadd.f32 %v43, %v173
    %v242 = vadd.f32 %v44, %v177
    %v243 = vadd.f32 %v45, %v181
    %v244 = vadd.f32 %v46, %v185
    %v245 = vadd.f32 %v47, %v189
    %v246 = vadd.f32 %v48, %v193
    %v247 = vadd.f32 %v49, %v197
    %v248 = vadd.f32 %v50, %v201
    %v249 = vadd.f32 %v51, %v205
    %v250 = vadd.f32 %v52, %v209
    %v251 = vadd.f32 %v53, %v213
    %v252 = vadd.f32 %v54, %v217
    %v253 = vadd.f32 %v55, %v221
    %254 = vst [vmem:[#allocation7] sm:$0xff] %v238
    %255 = vst [vmem:[#allocation7 + $0x8] sm:$0xff] %v239
    %256 = vst [vmem:[#allocation7 + $0x10] sm:$0xff] %v240
    %257 = vst [vmem:[#allocation7 + $0x18] sm:$0xff] %v241
    %258 = vst [vmem:[#allocation7 + $0x20] sm:$0xff] %v242
    %259 = vst [vmem:[#allocation7 + $0x28] sm:$0xff] %v243
    %260 = vst [vmem:[#allocation7 + $0x30] sm:$0xff] %v244
    %261 = vst [vmem:[#allocation7 + $0x38] sm:$0xff] %v245
    %262 = vst [vmem:[#allocation7 + $0x40] sm:$0xff] %v246
    %263 = vst [vmem:[#allocation7 + $0x48] sm:$0xff] %v247
    %264 = vst [vmem:[#allocation7 + $0x50] sm:$0xff] %v248
    %265 = vst [vmem:[#allocation7 + $0x58] sm:$0xff] %v249
    %266 = vst [vmem:[#allocation7 + $0x60] sm:$0xff] %v250
    %267 = vst [vmem:[#allocation7 + $0x68] sm:$0xff] %v251
    %268 = vst [vmem:[#allocation7 + $0x70] sm:$0xff] %v252
    %269 = vst [vmem:[#allocation7 + $0x78] sm:$0xff] %v253
    // Predicated region
    $region18: #{tpu_custom_call.1} parent=1 // pred_check
      _
    $region19: #{tpu_custom_call.1} parent=1 // pred_check_branch
      %271 = sbr.rel (0) target = $region21
    $region20: #{tpu_custom_call.1} parent=1 // pred_region
      %s273 = ssub.s32 2048, 2048
      %274 = vsyncadd [#allocation4], %s273
      %s275 = sshll.u32 [#allocation7], 4
      %s276 = int_to_ptr.vmem [resolvable:$true] %s275
      %281 = dma.vmem_to_hbm [thread:$0]  %s276, 2048, %s2, [#allocation4], 128, 128, 8
    $region21: #{tpu_custom_call.1} parent=1 // pred_fallthru
      _
    // Predicated region
    $region22: #{tpu_custom_call.1} parent=1 // pred_check
      _
    $region23: #{tpu_custom_call.1} parent=1 // pred_check_branch
      %283 = sbr.rel (0) target = $region25
    $region24: #{tpu_custom_call.1} parent=1 // pred_region
      %284 = dma.done [#allocation4], 2048
    $region25: #{tpu_custom_call.1} parent=1 // pred_fallthru
      _
    %285 = vsyncpa [#allocation3], 1
    %286 = vsyncpa [#allocation6], 1
    %287 = vsyncpa [#allocation4], 1

</llo_original>
